<compile_context>
chip_gen: v5e
topology: v5e:2x2
jax: 0.10.0
libtpu: 0.0.40
codegen_flags: <defaults>
</compile_context>

<pallas_src>
import functools
import math

import jax
import jax.numpy as jnp
from jax.experimental import pallas as pl
from jax.experimental.pallas import tpu as pltpu

GAMMA, ZETA = -0.1, 1.1

_LANE = 128
_SUBLANE = 8
_MAX_TILE_LANES = 8192            # lane-dim cap when the full extent is too wide
_TARGET_BLOCK_BYTES = 4 << 20     # ~4 MiB per f32 stream per block
_MIN_SPLIT_BYTES = 2 << 20        # only split for 2-TC parallelism above this


def _round_up(x, m):
    return (x + m - 1) // m * m


def _cdiv(a, b):
    return -(-a // b)


def _choose_tiles(rows, cols):
    """Pick (tile_r, tile_c). Each dim is either the full extent (no alignment
    requirement) or an (8,128)-aligned tile; ragged edges are masked by Pallas."""
    tile_c = cols if cols <= _MAX_TILE_LANES else _MAX_TILE_LANES
    grid_c = _cdiv(cols, tile_c)

    # Budget rows against the lane-padded width (VMEM footprint, not raw bytes).
    c_pad = _round_up(tile_c, _LANE)
    budget_rows = max(_SUBLANE, _TARGET_BLOCK_BYTES // (4 * c_pad))
    tile_r = max(_SUBLANE, (budget_rows // _SUBLANE) * _SUBLANE)

    # Keep >= 4 blocks on large problems so v7x's two TensorCores share work.
    if (rows * cols * 4 >= _MIN_SPLIT_BYTES and rows > _SUBLANE
            and grid_c * _cdiv(rows, tile_r) < 4):
        want_r_blocks = _cdiv(4, grid_c)
        tile_r = max(_SUBLANE, (_cdiv(rows, want_r_blocks) // _SUBLANE) * _SUBLANE)

    if tile_r >= rows:
        tile_r = rows            # full extent: legal even if rows % 8 != 0
    return tile_r, tile_c


def _vmem_limit_bytes(tile_r, tile_c):
    """Generation-aware VMEM budget for the chosen blocks (+ headroom)."""
    r_pad = _round_up(tile_r, _SUBLANE)
    c_pad = _round_up(tile_c, _LANE)
    big = 3 * 2 * r_pad * c_pad * 4                       # x, alpha, out; x2 buffers
    prm = 2 * 3 * max(r_pad * _LANE, _SUBLANE * c_pad) * 4  # (3,·,1)/(3,1,·) params
    need = big + prm + (2 << 20)                          # compiler scratch headroom
    try:
        phys = int(pltpu.get_tpu_info().vmem_capacity_bytes)
    except Exception:
        phys = 64 << 20                                   # conservative (v7x-sized)
    cap = (28 << 20) if phys <= (64 << 20) else (64 << 20)
    return int(min(cap, max(need, 4 << 20)))


# --------------------------------------------------------------------------
# Pallas kernel: one (tile_r, tile_c) block of the weight per grid point.
# Layout-agnostic: the per-channel params broadcast either as (tile_r, 1)
# columns or as (1, tile_c) rows, depending on how the wrapper packed them.
# --------------------------------------------------------------------------
def _adaround_kernel(x_ref, a_ref, p_ref, o_ref, *, n_levels, soft_target):
    x = x_ref[...].astype(jnp.float32)
    scale = p_ref[0]          # (tile_r, 1) or (1, tile_c)
    inv_scale = p_ref[1]      # exact 1/scale, hoisted in the wrapper
    zp = p_ref[2]

    # floor(x / scale) with the divide hoisted onto the tiny per-channel vector.
    x_floor = jnp.floor(x * inv_scale)

    a = a_ref[...].astype(jnp.float32)
    if soft_target:
        # get_soft_targets(): clamp(sigmoid(alpha)*(zeta-gamma)+gamma, 0, 1)
        # sigmoid via tanh -> single EUP transcendental, no VALU divide.
        sig = 0.5 * (jnp.tanh(0.5 * a) + 1.0)
        h = jnp.clip(sig * (ZETA - GAMMA) + GAMMA, 0.0, 1.0)
    else:
        # hard rounding decision, computed in-kernel
        h = (a >= 0.0).astype(jnp.float32)

    x_quant = jnp.clip(x_floor + h + zp, 0.0, float(n_levels - 1))
    o_ref[...] = ((x_quant - zp) * scale).astype(o_ref.dtype)


# --------------------------------------------------------------------------
# Wrapper: no padding, no output slicing; direct tiled streaming.
# --------------------------------------------------------------------------
def adaround_forward(x2d, alpha2d, scale, zero_point, *, n_levels,
                     soft_target=False, channel_axis=0, out_dtype=None,
                     tile_rows=None, tile_cols=None):
    """learned_hard_sigmoid AdaRound forward on a 2-D slab.

    channel_axis=0: x2d is (OC, D),  scale/zero_point are (OC, 1).
    channel_axis=1: x2d is (D, OC),  scale/zero_point are (1, OC).
    tile_rows / tile_cols (optional overrides) must be (8,128)-aligned or span
    the full dimension.
    """
    rows, cols = x2d.shape
    n_levels = int(n_levels)
    out_dtype = x2d.dtype if out_dtype is None else out_dtype

    tile_r, tile_c = _choose_tiles(rows, cols)
    if tile_rows is not None:
        tile_r = min(int(tile_rows), rows)
    if tile_cols is not None:
        tile_c = min(int(tile_cols), cols)
    grid = (_cdiv(rows, tile_r), _cdiv(cols, tile_c))

    scale = scale.astype(jnp.float32)
    zero_point = zero_point.astype(jnp.float32)
    inv_scale = 1.0 / scale
    # Fused per-channel params: (3, OC, 1) for channel_axis=0, (3, 1, OC) for 1.
    params = jnp.stack([scale, inv_scale, zero_point], axis=0)

    big_spec = pl.BlockSpec((tile_r, tile_c), lambda i, j: (i, j))
    if channel_axis == 0:
        prm_spec = pl.BlockSpec((3, tile_r, 1), lambda i, j: (0, i, 0))
    else:
        prm_spec = pl.BlockSpec((3, 1, tile_c), lambda i, j: (0, 0, j))

    kernel = functools.partial(_adaround_kernel, n_levels=n_levels,
                               soft_target=bool(soft_target))

    return pl.pallas_call(
        kernel,
        out_shape=jax.ShapeDtypeStruct((rows, cols), out_dtype),
        grid=grid,
        in_specs=[big_spec, big_spec, prm_spec],
        out_specs=big_spec,
        compiler_params=pltpu.CompilerParams(
            dimension_semantics=("parallel", "parallel"),
            vmem_limit_bytes=_vmem_limit_bytes(tile_r, tile_c)),
    )(x2d, alpha2d.astype(jnp.float32), params)


def adaround_forward_weight(weight, alpha, scale, zero_point, *, n_levels,
                            soft_target=False):
    """Conv/linear weight entry point: weight/alpha (OC, ...), scale/zp (OC, 1)."""
    oc = weight.shape[0]
    d = math.prod(weight.shape[1:])
    w2d = weight.reshape(oc, d)
    a2d = alpha.reshape(oc, d)
    scale = scale.reshape(oc, 1)
    zero_point = zero_point.reshape(oc, 1)

    if d < _LANE and oc > d:
        # Tiny reduction dim (e.g. RGB stem conv, D = 3*3*3): make OC the lane
        # dim so the output store is lane-dense. These arrays are small, so
        # the transpose pass cost is negligible.
        out = adaround_forward(w2d.T, a2d.T, scale.T, zero_point.T,
                               n_levels=n_levels, soft_target=soft_target,
                               channel_axis=1).T
    else:
        out = adaround_forward(w2d, a2d, scale, zero_point,
                               n_levels=n_levels, soft_target=soft_target,
                               channel_axis=0)
    return out.reshape(weight.shape)


# --------------------------------------------------------------------------
# Plain-JAX glue (parameter setup) and reference for verification.
# --------------------------------------------------------------------------
def make_uaq_params(w2d, n_bits):
    """Per-output-channel asymmetric min-max params (UniformAffineQuantizer)."""
    n_levels = 2 ** n_bits
    w_min = jnp.minimum(jnp.min(w2d, axis=1, keepdims=True), 0.0)
    w_max = jnp.maximum(jnp.max(w2d, axis=1, keepdims=True), 0.0)
    s = (w_max - w_min) / (n_levels - 1)
    s = jnp.maximum(s, 1e-8)
    zp = jnp.round(-w_min / s)
    return s.astype(jnp.float32), zp.astype(jnp.float32), n_levels


def init_alpha(w2d, scale):
    """alpha = -log((zeta-gamma)/(rest-gamma) - 1), rest = frac(w/scale)."""
    x_div = w2d / scale
    rest = x_div - jnp.floor(x_div)
    return (-jnp.log((ZETA - GAMMA) / (rest - GAMMA) - 1.0)).astype(jnp.float32)


def reference_forward(x2d, alpha2d, scale, zp, n_levels, soft_target):
    inv_scale = 1.0 / scale
    x_floor = jnp.floor(x2d * inv_scale)
    if soft_target:
        h = jnp.clip(jax.nn.sigmoid(alpha2d) * (ZETA - GAMMA) + GAMMA, 0.0, 1.0)
    else:
        h = (alpha2d >= 0.0).astype(x2d.dtype)
    x_quant = jnp.clip(x_floor + h + zp, 0.0, n_levels - 1)
    return (x_quant - zp) * scale


# TODO(synk): 'nearest', 'nearest_ste' and 'stochastic' round modes of the
# original module are not implemented (stochastic would need pltpu.prng_*).

if __name__ == "__main__":
    key = jax.random.PRNGKey(0)
    n_bits = 4
    k1, k2, k3 = jax.random.split(key, 3)

    def run_case(shape, k):
        oc = shape[0]
        d = math.prod(shape[1:])
        w = jax.random.normal(k, shape, dtype=jnp.float32) * 0.5
        w2d = w.reshape(oc, d)
        scale, zp, n_levels = make_uaq_params(w2d, n_bits)
        alpha2d = init_alpha(w2d, scale)
        alpha = alpha2d.reshape(shape)
        for soft in (False, True):
            out = adaround_forward_weight(w, alpha, scale, zp,
                                          n_levels=n_levels, soft_target=soft)
            out = jax.block_until_ready(out)
            ref = reference_forward(w2d, alpha2d, scale, zp, n_levels, soft)
            assert jnp.allclose(out.reshape(oc, d), ref, atol=2e-5, rtol=1e-5), shape

    # Regular small conv weight: (OC, D) layout, single full-extent block.
    run_case((32, 4, 3, 3), k1)
    # Tiny-D stem conv: transposed (D, OC) layout so OC is the lane dim.
    run_case((128, 3, 3, 3), k2)

    # Forced multi-block ragged grid to exercise tiled/partial-block path.
    oc, d = 40, 200
    w2d = jax.random.normal(k3, (oc, d), dtype=jnp.float32) * 0.5
    scale, zp, n_levels = make_uaq_params(w2d, n_bits)
    alpha2d = init_alpha(w2d, scale)
    out = adaround_forward(w2d, alpha2d, scale, zp, n_levels=n_levels,
                           soft_target=True, tile_rows=16, tile_cols=128)
    out = jax.block_until_ready(out)
    ref = reference_forward(w2d, alpha2d, scale, zp, n_levels, True)
    assert jnp.allclose(out, ref, atol=2e-5, rtol=1e-5)

    print("KERNEL_OK")
</pallas_src>

<mosaic_0001>
module attributes {stable_mosaic.version = 11 : i64} {
  func.func @_adaround_kernel(%arg0: i32, %arg1: i32, %arg2: memref<32x36xf32, #tpu.memory_space<vmem>>, %arg3: memref<32x36xf32, #tpu.memory_space<vmem>>, %arg4: memref<3x32x1xf32, #tpu.memory_space<vmem>>, %arg5: memref<32x36xf32, #tpu.memory_space<vmem>>) attributes {dimension_semantics = [#tpu.dimension_semantics<parallel>, #tpu.dimension_semantics<parallel>], iteration_bounds = array<i64: 1, 1>, scalar_prefetch = 0 : i64, scratch_operands = 0 : i64, tpu.core_type = #tpu.core_type<tc>, window_params = [{transform_indices = @transform_0, window_bounds = array<i64: 32, 36>}, {transform_indices = @transform_1, window_bounds = array<i64: 32, 36>}, {transform_indices = @transform_2, window_bounds = array<i64: 3, 32, 1>}, {transform_indices = @transform_3, window_bounds = array<i64: 32, 36>}]} {
    %c0 = arith.constant 0 : index
    %c0_0 = arith.constant 0 : index
    %0 = vector.load %arg2[%c0, %c0_0] : memref<32x36xf32, #tpu.memory_space<vmem>>, vector<32x36xf32>
    %c0_1 = arith.constant 0 : index
    %c0_2 = arith.constant 0 : index
    %c0_3 = arith.constant 0 : index
    %1 = vector.load %arg4[%c0_1, %c0_2, %c0_3] : memref<3x32x1xf32, #tpu.memory_space<vmem>>, vector<1x32x1xf32>
    %2 = vector.shape_cast %1 : vector<1x32x1xf32> to vector<32x1xf32>
    %c1 = arith.constant 1 : index
    %c0_4 = arith.constant 0 : index
    %c0_5 = arith.constant 0 : index
    %3 = vector.load %arg4[%c1, %c0_4, %c0_5] : memref<3x32x1xf32, #tpu.memory_space<vmem>>, vector<1x32x1xf32>
    %4 = vector.shape_cast %3 : vector<1x32x1xf32> to vector<32x1xf32>
    %c2 = arith.constant 2 : index
    %c0_6 = arith.constant 0 : index
    %c0_7 = arith.constant 0 : index
    %5 = vector.load %arg4[%c2, %c0_6, %c0_7] : memref<3x32x1xf32, #tpu.memory_space<vmem>>, vector<1x32x1xf32>
    %6 = vector.shape_cast %5 : vector<1x32x1xf32> to vector<32x1xf32>
    %7 = vector.broadcast %4 : vector<32x1xf32> to vector<32x36xf32>
    %8 = arith.mulf %0, %7 : vector<32x36xf32>
    %9 = math.floor %8 : vector<32x36xf32>
    %c0_8 = arith.constant 0 : index
    %c0_9 = arith.constant 0 : index
    %10 = vector.load %arg3[%c0_8, %c0_9] : memref<32x36xf32, #tpu.memory_space<vmem>>, vector<32x36xf32>
    %cst = arith.constant 0.000000e+00 : f32
    %11 = vector.broadcast %cst : f32 to vector<32x36xf32>
    %12 = arith.cmpf oge, %10, %11 : vector<32x36xf32>
    %13 = arith.extui %12 : vector<32x36xi1> to vector<32x36xi32>
    %14 = arith.sitofp %13 : vector<32x36xi32> to vector<32x36xf32>
    %15 = arith.addf %9, %14 : vector<32x36xf32>
    %16 = vector.broadcast %6 : vector<32x1xf32> to vector<32x36xf32>
    %17 = arith.addf %15, %16 : vector<32x36xf32>
    %cst_10 = arith.constant 0.000000e+00 : f32
    %cst_11 = arith.constant 1.500000e+01 : f32
    %18 = vector.broadcast %cst_10 : f32 to vector<32x36xf32>
    %19 = arith.maximumf %18, %17 : vector<32x36xf32>
    %20 = vector.broadcast %cst_11 : f32 to vector<32x36xf32>
    %21 = arith.minimumf %20, %19 : vector<32x36xf32>
    %22 = vector.broadcast %6 : vector<32x1xf32> to vector<32x36xf32>
    %23 = arith.subf %21, %22 : vector<32x36xf32>
    %24 = vector.broadcast %2 : vector<32x1xf32> to vector<32x36xf32>
    %25 = arith.mulf %23, %24 : vector<32x36xf32>
    %c0_12 = arith.constant 0 : index
    %c0_13 = arith.constant 0 : index
    %26 = vector.load %arg5[%c0_12, %c0_13] : memref<32x36xf32, #tpu.memory_space<vmem>>, vector<32x36xf32>
    tpu.vector_store %arg5[%c0_12, %c0_13], %25 {strides = array<i32>} : memref<32x36xf32, #tpu.memory_space<vmem>>, vector<32x36xf32>,
    return
  }
  func.func @transform_0(%arg0: i32, %arg1: i32) -> (i32, i32) {
    %c0_i32 = arith.constant 0 : i32
    return %arg0, %arg1 : i32, i32
  }
  func.func @transform_1(%arg0: i32, %arg1: i32) -> (i32, i32) {
    %c0_i32 = arith.constant 0 : i32
    return %arg0, %arg1 : i32, i32
  }
  func.func @transform_2(%arg0: i32, %arg1: i32) -> (i32, i32, i32) {
    %c0_i32 = arith.constant 0 : i32
    %c0_i32_0 = arith.constant 0 : i32
    %c0_i32_1 = arith.constant 0 : i32
    return %c0_i32, %arg0, %c0_i32_0 : i32, i32, i32
  }
  func.func @transform_3(%arg0: i32, %arg1: i32) -> (i32, i32) {
    %c0_i32 = arith.constant 0 : i32
    return %arg0, %arg1 : i32, i32
  }
}

</mosaic_0001>

<llo_original>
// kernel: tpu_custom_call.1
$region0: #{tpu_custom_call.1}
  #allocation0 [shape = 'u32[]', space=smem, size = 0x4, offset = 0x4, fixed_abs, tag = 'smem constant byte address 0x4 - core index']
  #allocation1 [shape = 'u32[72,128]{1,0:T(1,128)}', space=vmem, size = 0x9000, scoped, tag = 'internal scratch']
  %s0 = inlined_call_operand.vmem [shape: f32[32,36], index: 0, kind: input, shape index: {}]
  %s1 = inlined_call_operand.vmem [shape: f32[32,36], index: 1, kind: input, shape index: {}]
  %s2 = inlined_call_operand.vmem [shape: f32[3,32,1], index: 2, kind: input, shape index: {}]
  %s3 = inlined_call_operand.hbm [shape: f32[32,36], index: 3, kind: output, shape index: {}]
  %s4 = sld [smem:[#allocation0]]
  $region22: #{tpu_custom_call.1} parent=0
    _
  %s6 = ssub.s32 1, %s4
  %s7 = scalar_select 0, %s6, %s4
  $region1: #{tpu_custom_call.1} parent=0
    #allocation2 [shape = 'u8[16384]{0}', space=vmem, size = 0x4000, scoped, tag = 'output window, operand 0, single buffered']
    #allocation3 [shape = 's32[1]{0}', space=sflag, size = 0x4, scoped, tag = 'scoped memory for tpu_custom_call.1']
    %8 = vsyncpa [#allocation3], 0
    // Predicated region
    $region2: #{tpu_custom_call.1} parent=1 // pred_check
      _
    $region3: #{tpu_custom_call.1} parent=1 // pred_check_branch
      %10 = sbr.rel (0) target = $region5
    $region4: #{tpu_custom_call.1} parent=1 // pred_region
      _
    $region5: #{tpu_custom_call.1} parent=1 // pred_fallthru
      _
    // Predicated region
    $region6: #{tpu_custom_call.1} parent=1 // pred_check
      _
    $region7: #{tpu_custom_call.1} parent=1 // pred_check_branch
      %12 = sbr.rel (0) target = $region9
    $region8: #{tpu_custom_call.1} parent=1 // pred_region
      _
    $region9: #{tpu_custom_call.1} parent=1 // pred_fallthru
      _
    // Predicated region
    $region10: #{tpu_custom_call.1} parent=1 // pred_check
      _
    $region11: #{tpu_custom_call.1} parent=1 // pred_check_branch
      %14 = sbr.rel (0) target = $region13
    $region12: #{tpu_custom_call.1} parent=1 // pred_region
      _
    $region13: #{tpu_custom_call.1} parent=1 // pred_fallthru
      _
    %v15 = vld [vmem:[%s0] sm:$0xff]
    %v16 = vld [vmem:[%s0 + $0x8] sm:$0xff]
    %v17 = vld [vmem:[%s0 + $0x10] sm:$0xff]
    %v18 = vld [vmem:[%s0 + $0x18] sm:$0xff]
    %v19 = vld [vmem:[%s2] sm:$0xff]
    %v20 = vld [vmem:[%s2 + $0x8] sm:$0xff]
    %v21 = vld [vmem:[%s2 + $0x10] sm:$0xff]
    %v22 = vld [vmem:[%s2 + $0x18] sm:$0xff]
    %s23 = scalar_lea.vmem %s2, 32
    %v24 = vld [vmem:[%s23] sm:$0xff]
    %v25 = vld [vmem:[%s23 + $0x8] sm:$0xff]
    %v26 = vld [vmem:[%s23 + $0x10] sm:$0xff]
    %v27 = vld [vmem:[%s23 + $0x18] sm:$0xff]
    %s28 = scalar_lea.vmem %s2, 64
    %v29 = vld [vmem:[%s28] sm:$0xff]
    %v30 = vld [vmem:[%s28 + $0x8] sm:$0xff]
    %v31 = vld [vmem:[%s28 + $0x10] sm:$0xff]
    %v32 = vld [vmem:[%s28 + $0x18] sm:$0xff]
    %34 = vset.pattern.permute.xlu0 0
    %35 = vperm.xlu0 %34, %v24
    %v36 = vpop.permute.xlu0 %35
    %39 = vset.pattern.permute.xlu0 0
    %40 = vperm.xlu0 %39, %v25
    %v41 = vpop.permute.xlu0 %40
    %44 = vset.pattern.permute.xlu0 0
    %45 = vperm.xlu0 %44, %v26
    %v46 = vpop.permute.xlu0 %45
    %49 = vset.pattern.permute.xlu0 0
    %50 = vperm.xlu0 %49, %v27
    %v51 = vpop.permute.xlu0 %50
    %v53 = vmul.f32 %v15, %v36
    %v54 = vmul.f32 %v16, %v41
    %v55 = vmul.f32 %v17, %v46
    %v56 = vmul.f32 %v18, %v51
    %v57 = vfloor.f32 %v53
    %v58 = vfloor.f32 %v54
    %v59 = vfloor.f32 %v55
    %v60 = vfloor.f32 %v56
    %v61 = vld [vmem:[%s1] sm:$0xff]
    %v62 = vld [vmem:[%s1 + $0x8] sm:$0xff]
    %v63 = vld [vmem:[%s1 + $0x10] sm:$0xff]
    %v64 = vld [vmem:[%s1 + $0x18] sm:$0xff]
    %vm65 = vcmp.ge.f32.partialorder %v61, 0.0
    %vm66 = vcmp.ge.f32.partialorder %v62, 0.0
    %vm67 = vcmp.ge.f32.partialorder %v63, 0.0
    %vm68 = vcmp.ge.f32.partialorder %v64, 0.0
    %v69 = vsel %vm65, 1, 0
    %v70 = vsel %vm66, 1, 0
    %v71 = vsel %vm67, 1, 0
    %v72 = vsel %vm68, 1, 0
    %v73 = vcvt.s32.f32 %v69
    %v74 = vcvt.s32.f32 %v70
    %v75 = vcvt.s32.f32 %v71
    %v76 = vcvt.s32.f32 %v72
    %v77 = vadd.f32 %v57, %v73
    %v78 = vadd.f32 %v58, %v74
    %v79 = vadd.f32 %v59, %v75
    %v80 = vadd.f32 %v60, %v76
    %82 = vset.pattern.permute.xlu0 0
    %83 = vperm.xlu0 %82, %v29
    %v84 = vpop.permute.xlu0 %83
    %87 = vset.pattern.permute.xlu0 0
    %88 = vperm.xlu0 %87, %v30
    %v89 = vpop.permute.xlu0 %88
    %92 = vset.pattern.permute.xlu0 0
    %93 = vperm.xlu0 %92, %v31
    %v94 = vpop.permute.xlu0 %93
    %97 = vset.pattern.permute.xlu0 0
    %98 = vperm.xlu0 %97, %v32
    %v99 = vpop.permute.xlu0 %98
    %v101 = vadd.f32 %v77, %v84
    %v102 = vadd.f32 %v78, %v89
    %v103 = vadd.f32 %v79, %v94
    %v104 = vadd.f32 %v80, %v99
    %v105 = vmax.f32 %v101, 0.0
    %v106 = vmax.f32 %v102, 0.0
    %v107 = vmax.f32 %v103, 0.0
    %v108 = vmax.f32 %v104, 0.0
    %v109 = vmin.f32 %v105, 15.0
    %v110 = vmin.f32 %v106, 15.0
    %v111 = vmin.f32 %v107, 15.0
    %v112 = vmin.f32 %v108, 15.0
    %v113 = vsub.f32 %v109, %v84
    %v114 = vsub.f32 %v110, %v89
    %v115 = vsub.f32 %v111, %v94
    %v116 = vsub.f32 %v112, %v99
    %118 = vset.pattern.permute.xlu0 0
    %119 = vperm.xlu0 %118, %v19
    %v120 = vpop.permute.xlu0 %119
    %123 = vset.pattern.permute.xlu0 0
    %124 = vperm.xlu0 %123, %v20
    %v125 = vpop.permute.xlu0 %124
    %128 = vset.pattern.permute.xlu0 0
    %129 = vperm.xlu0 %128, %v21
    %v130 = vpop.permute.xlu0 %129
    %133 = vset.pattern.permute.xlu0 0
    %134 = vperm.xlu0 %133, %v22
    %v135 = vpop.permute.xlu0 %134
    %v137 = vmul.f32 %v113, %v120
    %v138 = vmul.f32 %v114, %v125
    %v139 = vmul.f32 %v115, %v130
    %v140 = vmul.f32 %v116, %v135
    %vm141 = vcmask 293888
    %142 = vst.msk [vmem:[#allocation2] sm:$0xff] %vm141, %v137
    %143 = vst.msk [vmem:[#allocation2 + $0x8] sm:$0xff] %vm141, %v138
    %144 = vst.msk [vmem:[#allocation2 + $0x10] sm:$0xff] %vm141, %v139
    %145 = vst.msk [vmem:[#allocation2 + $0x18] sm:$0xff] %vm141, %v140
    // Predicated region
    $region14: #{tpu_custom_call.1} parent=1 // pred_check
      _
    $region15: #{tpu_custom_call.1} parent=1 // pred_check_branch
      %147 = sbr.rel (0) target = $region17
    $region16: #{tpu_custom_call.1} parent=1 // pred_region
      %149 = vsyncadd [#allocation3], 0
      %s150 = sshll.u32 [#allocation2], 4
      %s151 = int_to_ptr.vmem [resolvable:$true] %s150
      %s152 = sshll.u32 %s3, 4
      %s153 = int_to_ptr.hbm [resolvable:$true] %s152
      %158 = dma.vmem_to_hbm [thread:$0]  %s151, 512, %s153, [#allocation3], 128, 128, 8
    $region17: #{tpu_custom_call.1} parent=1 // pred_fallthru
      _
    // Predicated region
    $region18: #{tpu_custom_call.1} parent=1 // pred_check
      _
    $region19: #{tpu_custom_call.1} parent=1 // pred_check_branch
      %160 = sbr.rel (0) target = $region21
    $region20: #{tpu_custom_call.1} parent=1 // pred_region
      %162 = dma.done [#allocation3], 512
    $region21: #{tpu_custom_call.1} parent=1 // pred_fallthru
      _
    %163 = vsyncpa [#allocation3], 1

</llo_original>
